<compile_context>
chip_gen: v7x
topology: tpu7x:2x2x1
jax: 0.10.0
libtpu: 0.0.40
codegen_flags: <defaults>
</compile_context>

<pallas_src>
import jax
import jax.numpy as jnp
from jax.experimental import pallas as pl
from jax.experimental.pallas import tpu as pltpu


def _round_up(a: int, b: int) -> int:
    return -(-a // b) * b


def _divisor_tile(total: int, pref: int) -> int:
    """Largest multiple of 128 that divides `total` (a multiple of 128), <= pref."""
    t = max(128, (min(pref, total) // 128) * 128)
    while total % t:
        t -= 128
    return t


def _vmem_budget() -> int:
    """~0.85 of this generation's per-core VMEM (falls back to a safe 64 MiB)."""
    try:
        cap = int(pltpu.get_tpu_info().vmem_capacity_bytes)
    except Exception:
        cap = 64 * 1024 * 1024
    return int(0.85 * cap)


def _pad_2d(a, rows, cols, dtype):
    """Cast/zero-pad a 2-D array; no-op (no copy) when already the right shape/dtype."""
    if a.dtype != dtype:
        a = a.astype(dtype)
    r, c = a.shape
    if r == rows and c == cols:
        return a
    return jnp.zeros((rows, cols), dtype).at[:r, :c].set(a)


def _mlp_step(x_ref, w1_ref, b1_ref, w2_ref, b2_ref, acc_ref, o_ref):
    """One (row-tile i, out-tile j, hidden-chunk k) grid step. acc_ref may be o_ref."""
    k = pl.program_id(2)

    @pl.when(k == 0)
    def _init():
        # Fold the fc2 bias into the (resident) accumulator once per (i, j) tile.
        acc_ref[...] = jnp.broadcast_to(b2_ref[...], acc_ref.shape)

    # fc1 chunk: [tm, Din_pad] @ [Din_pad, tk], f32 accumulation on the MXU.
    h = jnp.dot(x_ref[...], w1_ref[...], preferred_element_type=jnp.float32)
    h = h + b1_ref[...]
    # Exact (erf) GELU -- matches torch.nn.GELU()'s default formulation.
    h = 0.5 * h * (1.0 + jax.lax.erf(h * jnp.float32(0.7071067811865476)))
    # fc2 chunk: [tm, tk] @ [tk, tn], accumulated in f32.
    acc_ref[...] += jnp.dot(h.astype(w2_ref.dtype), w2_ref[...],
                            preferred_element_type=jnp.float32)

    # Dropout(p=0.0) is the identity -> nothing to do.
    if o_ref is not None:
        @pl.when(k == pl.num_programs(2) - 1)
        def _store():
            o_ref[...] = acc_ref[...].astype(o_ref.dtype)


def _mlp_kernel_f32out(x_ref, w1_ref, b1_ref, w2_ref, b2_ref, o_ref):
    # float32 output: accumulate directly into the resident output tile.
    _mlp_step(x_ref, w1_ref, b1_ref, w2_ref, b2_ref, o_ref, None)


def _mlp_kernel_scratch(x_ref, w1_ref, b1_ref, w2_ref, b2_ref, o_ref, acc_ref):
    # non-f32 output: f32 VMEM scratch accumulator, cast once at the last k.
    _mlp_step(x_ref, w1_ref, b1_ref, w2_ref, b2_ref, acc_ref, o_ref)


def mlp_pallas(x, w1, b1, w2, b2, *, tm=512, tk_hidden=512, compute_dtype=None,
               weight_buffers=None):
    """x: [N, Din]; w1: [Din, Dh]; b1: [Dh]; w2: [Dh, Dout]; b2: [Dout].

    compute_dtype: optional dtype for the matmul operands (e.g. jnp.bfloat16);
    biases / GELU / accumulation stay in float32.
    weight_buffers: >2 enables deeper pipelining of the streamed w1/w2 chunks
    (useful on 128-MiB-VMEM parts like v5e).
    """
    n, d_in = x.shape
    d_h = w1.shape[1]
    d_out = w2.shape[1]
    out_dtype = jnp.dtype(x.dtype)
    cdt = jnp.dtype(compute_dtype) if compute_dtype is not None else jnp.dtype(x.dtype)
    ib = cdt.itemsize
    ob = out_dtype.itemsize
    sub = 8 * (4 // ib)                 # packed sublane tile: 8 f32 / 16 bf16 / 32 int8
    acc_in_out = out_dtype == jnp.dtype(jnp.float32)

    # --- feature padding: lane-dense loads/stores + full MXU K passes --------
    d_in_pad = _round_up(d_in, 128)
    d_h_128 = _round_up(d_h, 128)
    d_out_pad = _round_up(d_out, 128)

    # Hidden chunk: keep tk large (fewer k steps / fewer accumulator RMWs) and
    # pad the hidden dim up to a multiple of tk unless that wastes > ~25%.
    tk = min(_round_up(tk_hidden, 128), d_h_128)
    if d_h_128 % tk:
        padded = _round_up(d_h_128, tk)
        if padded - d_h_128 <= d_h_128 // 4:
            d_h_pad = padded
        else:
            tk = _divisor_tile(d_h_128, tk)
            d_h_pad = d_h_128
    else:
        d_h_pad = d_h_128

    # --- row tile / output tile selection under the VMEM budget --------------
    budget = _vmem_budget()
    n_sub = _round_up(n, sub)
    tm = max(sub, min(_round_up(tm, sub), n_sub))
    tn = d_out_pad
    n_w_buf = max(2, weight_buffers or 2)

    def _footprint(tm_, tn_, tk_):
        return (2 * tm_ * d_in_pad * ib             # x row tile (double-buffered)
                + n_w_buf * d_in_pad * tk_ * ib     # w1 chunk (streamed)
                + 2 * tk_ * 4                       # b1 chunk
                + n_w_buf * tk_ * tn_ * ib          # w2 chunk (streamed)
                + 2 * tn_ * 4                       # b2 tile
                + 2 * tm_ * tn_ * ob                # output tile
                + (0 if acc_in_out else tm_ * tn_ * 4)   # f32 accumulator scratch
                + tm_ * tk_ * 4)                    # live fc1 intermediate

    # Shrink in order of least performance impact until the footprint fits.
    while _footprint(tm, tn, tk) > budget:
        if tn >= 2048:
            tn = _divisor_tile(d_out_pad, tn // 2)      # tile the output features
        elif tk >= 512:
            tk = _divisor_tile(d_h_pad, tk // 2)        # smaller hidden chunks
        elif tm > 2 * sub:
            tm = max(sub, _round_up(tm // 2, sub))      # last resort: shrink rows
        elif tn > 128:
            tn = _divisor_tile(d_out_pad, tn // 2)
        elif tk > 128:
            tk = _divisor_tile(d_h_pad, tk // 2)
        else:
            break

    # >= 2 row tiles when possible (software pipelining + both v7x TCs) and
    # prefer an even row-tile count so the 'parallel' axis splits evenly.
    if n_sub // tm < 2 and n_sub >= 2 * sub:
        tm = _round_up(-(-n_sub // 2), sub)
    g0 = -(-n_sub // tm)
    if g0 > 2 and g0 % 2 == 1:
        tm_even = max(sub, _round_up(-(-n_sub // (g0 + 1)), sub))
        if -(-n_sub // tm_even) % 2 == 0:
            tm = tm_even
    n_pad = _round_up(n, tm)

    # --- pad operands (no-ops when already aligned); zero padding contributes
    #     exactly 0 through fc1 / GELU / fc2, padded rows are sliced off. ----
    # TODO(synk): for repeated forward passes, pre-pad/cast the weights once and
    # reuse them across calls (the _pad_2d calls below are no-ops in that case).
    x_p = _pad_2d(x, n_pad, d_in_pad, cdt)
    w1_p = _pad_2d(w1, d_in_pad, d_h_pad, cdt)
    b1_p = _pad_2d(b1.reshape(1, -1), 1, d_h_pad, jnp.float32)
    w2_p = _pad_2d(w2, d_h_pad, d_out_pad, cdt)
    b2_p = _pad_2d(b2.reshape(1, -1), 1, d_out_pad, jnp.float32)

    grid = (n_pad // tm, d_out_pad // tn, d_h_pad // tk)
    n_i, n_j, n_k = grid

    w_mode = dict(pipeline_mode=pl.Buffered(n_w_buf)) if n_w_buf > 2 else {}
    in_specs = [
        pl.BlockSpec((tm, d_in_pad), lambda i, j, k: (i, 0)),            # x (reused over j,k)
        pl.BlockSpec((d_in_pad, tk), lambda i, j, k: (0, k), **w_mode),  # w1 chunk (streams)
        pl.BlockSpec((1, tk), lambda i, j, k: (0, k)),                   # b1 chunk
        pl.BlockSpec((tk, tn), lambda i, j, k: (k, j), **w_mode),        # w2 chunk (streams)
        pl.BlockSpec((1, tn), lambda i, j, k: (0, j)),                   # b2 tile
    ]
    out_spec = pl.BlockSpec((tm, tn), lambda i, j, k: (i, j))

    kernel = _mlp_kernel_f32out if acc_in_out else _mlp_kernel_scratch
    scratch = () if acc_in_out else (pltpu.VMEM((tm, tn), jnp.float32),)

    cost = pl.CostEstimate(
        flops=int(2 * n_pad * d_in_pad * d_h_pad * n_j
                  + 2 * n_pad * d_h_pad * d_out_pad),
        transcendentals=int(n_pad * d_h_pad * n_j),        # erf inside the GELU
        bytes_accessed=int(n_pad * d_in_pad * ib
                           + n_i * n_j * d_in_pad * d_h_pad * ib
                           + n_i * d_h_pad * d_out_pad * ib
                           + n_pad * d_out_pad * ob),
    )

    out = pl.pallas_call(
        kernel,
        out_shape=jax.ShapeDtypeStruct((n_pad, d_out_pad), out_dtype),
        grid_spec=pltpu.PrefetchScalarGridSpec(
            num_scalar_prefetch=0,
            grid=grid,
            in_specs=in_specs,
            out_specs=out_spec,
            scratch_shapes=scratch,
        ),
        compiler_params=pltpu.CompilerParams(
            dimension_semantics=("parallel", "parallel", "arbitrary"),
            vmem_limit_bytes=budget,
        ),
        cost_estimate=cost,
    )(x_p, w1_p, b1_p, w2_p, b2_p)

    return out[:n, :d_out]


def mlp_reference(x, w1, b1, w2, b2):
    h = x @ w1 + b1
    h = 0.5 * h * (1.0 + jax.lax.erf(h / jnp.sqrt(2.0).astype(h.dtype)))
    return h @ w2 + b2


if __name__ == "__main__":
    # Module config: in_features=32, hidden_features=64, out_features=32, drop=0.0
    batch, seq = 2, 8
    d_in, d_h, d_out = 32, 64, 32

    key = jax.random.PRNGKey(0)
    kx, kw1, kb1, kw2, kb2, kx2 = jax.random.split(key, 6)

    x = jax.random.normal(kx, (batch, seq, d_in), dtype=jnp.float32)
    w1 = jax.random.normal(kw1, (d_in, d_h), dtype=jnp.float32) * (1.0 / jnp.sqrt(d_in))
    b1 = jax.random.normal(kb1, (d_h,), dtype=jnp.float32) * 0.01
    w2 = jax.random.normal(kw2, (d_h, d_out), dtype=jnp.float32) * (1.0 / jnp.sqrt(d_h))
    b2 = jax.random.normal(kb2, (d_out,), dtype=jnp.float32) * 0.01

    x_flat = x.reshape(batch * seq, d_in)     # flatten leading dims -> token rows

    # f32 path (matches the torch forward semantics; accumulates directly into o_ref)
    out = mlp_pallas(x_flat, w1, b1, w2, b2).reshape(batch, seq, d_out)
    jax.block_until_ready(out)
    ref = mlp_reference(x_flat, w1, b1, w2, b2).reshape(batch, seq, d_out)
    assert jnp.allclose(out, ref, atol=1e-5, rtol=1e-5), "f32 mismatch vs reference"

    # ragged token count (exercises row padding / tail handling)
    x_tail = jax.random.normal(kx2, (13, d_in), dtype=jnp.float32)
    out_tail = mlp_pallas(x_tail, w1, b1, w2, b2)
    jax.block_until_ready(out_tail)
    ref_tail = mlp_reference(x_tail, w1, b1, w2, b2)
    assert jnp.allclose(out_tail, ref_tail, atol=1e-5, rtol=1e-5), "tail mismatch"

    # bf16-matmul path (MXU-native operands; f32 bias/GELU/accumulation epilogue)
    out_bf16 = mlp_pallas(x_flat, w1, b1, w2, b2, compute_dtype=jnp.bfloat16)
    jax.block_until_ready(out_bf16)
    err = float(jnp.max(jnp.abs(out_bf16.reshape(batch, seq, d_out) - ref)))
    assert err < 0.2, f"bf16 path error too large: {err}"

    print("KERNEL_OK")
</pallas_src>

<mosaic_0001>
module attributes {stable_mosaic.version = 11 : i64} {
  func.func @_mlp_kernel_f32out(%arg0: i32, %arg1: i32, %arg2: i32, %arg3: memref<8x128xf32, #tpu.memory_space<vmem>>, %arg4: memref<128x128xf32, #tpu.memory_space<vmem>>, %arg5: memref<1x128xf32, #tpu.memory_space<vmem>>, %arg6: memref<128x128xf32, #tpu.memory_space<vmem>>, %arg7: memref<1x128xf32, #tpu.memory_space<vmem>>, %arg8: memref<8x128xf32, #tpu.memory_space<vmem>>) attributes {dimension_semantics = [#tpu.dimension_semantics<parallel>, #tpu.dimension_semantics<parallel>, #tpu.dimension_semantics<arbitrary>], iteration_bounds = array<i64: 2, 1, 1>, scalar_prefetch = 0 : i64, scratch_operands = 0 : i64, tpu.core_type = #tpu.core_type<tc>, window_params = [{transform_indices = @transform_0, window_bounds = array<i64: 8, 128>}, {transform_indices = @transform_1, window_bounds = array<i64: 128, 128>}, {transform_indices = @transform_2, window_bounds = array<i64: 1, 128>}, {transform_indices = @transform_3, window_bounds = array<i64: 128, 128>}, {transform_indices = @transform_4, window_bounds = array<i64: 1, 128>}, {transform_indices = @transform_5, window_bounds = array<i64: 8, 128>}]} {
    %c0_i32 = arith.constant 0 : i32
    %0 = arith.cmpi eq, %arg2, %c0_i32 : i32
    %1 = arith.extui %0 : i1 to i32
    %c0_i32_0 = arith.constant 0 : i32
    %2 = arith.cmpi ne, %1, %c0_i32_0 : i32
    scf.if %2 {
      %c0_16 = arith.constant 0 : index
      %c0_17 = arith.constant 0 : index
      %22 = vector.load %arg7[%c0_16, %c0_17] : memref<1x128xf32, #tpu.memory_space<vmem>>, vector<1x128xf32>
      %23 = vector.shape_cast %22 : vector<1x128xf32> to vector<1x128xf32>
      %24 = vector.broadcast %23 : vector<1x128xf32> to vector<8x128xf32>
      %c0_18 = arith.constant 0 : index
      %c0_19 = arith.constant 0 : index
      %25 = vector.load %arg8[%c0_18, %c0_19] : memref<8x128xf32, #tpu.memory_space<vmem>>, vector<8x128xf32>
      tpu.vector_store %arg8[%c0_18, %c0_19], %24 {strides = array<i32>} : memref<8x128xf32, #tpu.memory_space<vmem>>, vector<8x128xf32>,
    } else {
    }
    %c0 = arith.constant 0 : index
    %c0_1 = arith.constant 0 : index
    %3 = vector.load %arg3[%c0, %c0_1] : memref<8x128xf32, #tpu.memory_space<vmem>>, vector<8x128xf32>
    %c0_2 = arith.constant 0 : index
    %c0_3 = arith.constant 0 : index
    %4 = vector.load %arg4[%c0_2, %c0_3] : memref<128x128xf32, #tpu.memory_space<vmem>>, vector<128x128xf32>
    %cst = arith.constant dense<0.000000e+00> : vector<8x128xf32>
    %5 = tpu.matmul %3, %4, %cst {dimension_numbers = #tpu.dot_dimension_numbers<[1], [0], [0], [1], [0, 0, 1, 1], [], []>} : vector<8x128xf32>, vector<128x128xf32>, vector<8x128xf32> -> vector<8x128xf32>
    %c0_4 = arith.constant 0 : index
    %c0_5 = arith.constant 0 : index
    %6 = vector.load %arg5[%c0_4, %c0_5] : memref<1x128xf32, #tpu.memory_space<vmem>>, vector<1x128xf32>
    %7 = vector.broadcast %6 : vector<1x128xf32> to vector<8x128xf32>
    %8 = arith.addf %5, %7 : vector<8x128xf32>
    %cst_6 = arith.constant 5.000000e-01 : f32
    %9 = vector.broadcast %cst_6 : f32 to vector<8x128xf32>
    %10 = arith.mulf %9, %8 : vector<8x128xf32>
    %cst_7 = arith.constant 0.707106769 : f32
    %11 = vector.broadcast %cst_7 : f32 to vector<8x128xf32>
    %12 = arith.mulf %8, %11 : vector<8x128xf32>
    %13 = math.erf %12 : vector<8x128xf32>
    %cst_8 = arith.constant 1.000000e+00 : f32
    %14 = vector.broadcast %cst_8 : f32 to vector<8x128xf32>
    %15 = arith.addf %14, %13 : vector<8x128xf32>
    %16 = arith.mulf %10, %15 : vector<8x128xf32>
    %c0_9 = arith.constant 0 : index
    %c0_10 = arith.constant 0 : index
    %17 = vector.load %arg8[%c0_9, %c0_10] : memref<8x128xf32, #tpu.memory_space<vmem>>, vector<8x128xf32>
    %c0_11 = arith.constant 0 : index
    %c0_12 = arith.constant 0 : index
    %18 = vector.load %arg6[%c0_11, %c0_12] : memref<128x128xf32, #tpu.memory_space<vmem>>, vector<128x128xf32>
    %cst_13 = arith.constant dense<0.000000e+00> : vector<8x128xf32>
    %19 = tpu.matmul %16, %18, %cst_13 {dimension_numbers = #tpu.dot_dimension_numbers<[1], [0], [0], [1], [0, 0, 1, 1], [], []>} : vector<8x128xf32>, vector<128x128xf32>, vector<8x128xf32> -> vector<8x128xf32>
    %20 = arith.addf %17, %19 : vector<8x128xf32>
    %c0_14 = arith.constant 0 : index
    %c0_15 = arith.constant 0 : index
    %21 = vector.load %arg8[%c0_14, %c0_15] : memref<8x128xf32, #tpu.memory_space<vmem>>, vector<8x128xf32>
    tpu.vector_store %arg8[%c0_14, %c0_15], %20 {strides = array<i32>} : memref<8x128xf32, #tpu.memory_space<vmem>>, vector<8x128xf32>,
    return
  }
  func.func @transform_0(%arg0: i32, %arg1: i32, %arg2: i32) -> (i32, i32) {
    %c0_i32 = arith.constant 0 : i32
    %c0_i32_0 = arith.constant 0 : i32
    return %arg0, %c0_i32 : i32, i32
  }
  func.func @transform_1(%arg0: i32, %arg1: i32, %arg2: i32) -> (i32, i32) {
    %c0_i32 = arith.constant 0 : i32
    %c0_i32_0 = arith.constant 0 : i32
    return %c0_i32, %arg2 : i32, i32
  }
  func.func @transform_2(%arg0: i32, %arg1: i32, %arg2: i32) -> (i32, i32) {
    %c0_i32 = arith.constant 0 : i32
    %c0_i32_0 = arith.constant 0 : i32
    return %c0_i32, %arg2 : i32, i32
  }
  func.func @transform_3(%arg0: i32, %arg1: i32, %arg2: i32) -> (i32, i32) {
    %c0_i32 = arith.constant 0 : i32
    return %arg2, %arg1 : i32, i32
  }
  func.func @transform_4(%arg0: i32, %arg1: i32, %arg2: i32) -> (i32, i32) {
    %c0_i32 = arith.constant 0 : i32
    %c0_i32_0 = arith.constant 0 : i32
    return %c0_i32, %arg1 : i32, i32
  }
  func.func @transform_5(%arg0: i32, %arg1: i32, %arg2: i32) -> (i32, i32) {
    %c0_i32 = arith.constant 0 : i32
    return %arg0, %arg1 : i32, i32
  }
}

</mosaic_0001>

<llo_original>
// kernel: tpu_custom_call.1
$region0: #{tpu_custom_call.1}
  #allocation0 [shape = 'u32[]', space=smem, size = 0x4, offset = 0x4, fixed_abs, tag = 'smem constant byte address 0x4 - core index']
  #allocation1 [shape = 'u32[144,128]{1,0:T(1,128)}', space=vmem, size = 0x12000, scoped, tag = 'internal scratch']
  %s0 = inlined_call_operand.hbm [shape: f32[16,128], index: 0, kind: input, shape index: {}]
  %s1 = inlined_call_operand.hbm [shape: f32[128,128], index: 1, kind: input, shape index: {}]
  %s2 = inlined_call_operand.vmem [shape: f32[1,128], index: 2, kind: input, shape index: {}]
  %s3 = inlined_call_operand.hbm [shape: f32[128,128], index: 3, kind: input, shape index: {}]
  %s4 = inlined_call_operand.vmem [shape: f32[1,128], index: 4, kind: input, shape index: {}]
  %s5 = inlined_call_operand.hbm [shape: f32[16,128], index: 5, kind: output, shape index: {}]
  %s6 = sld [smem:[#allocation0]]
  $region69: #{tpu_custom_call.1} parent=0
    _
  %s8 = ssub.s32 1, %s6
  %s9 = scalar_select 0, %s8, %s6
  $region1: #{tpu_custom_call.1} parent=0
    #allocation2 [shape = 'u8[8192]{0}', space=vmem, size = 0x2000, scoped, tag = 'input window, operand 0']
    #allocation3 [shape = 's32[2]{0}', space=sflag, size = 0x8, scoped, tag = 'scoped memory for tpu_custom_call.1']
    #allocation4 [shape = 's32[2]{0}', space=sflag, size = 0x8, scoped, tag = 'scoped memory for tpu_custom_call.1']
    #allocation5 [shape = 'u8[65536]{0}', space=vmem, size = 0x10000, scoped, tag = 'input window, operand 1, single buffered']
    #allocation6 [shape = 's32[1]{0}', space=sflag, size = 0x4, scoped, tag = 'scoped memory for tpu_custom_call.1']
    #allocation7 [shape = 'u8[65536]{0}', space=vmem, size = 0x10000, scoped, tag = 'input window, operand 3, single buffered']
    #allocation8 [shape = 'u8[8192]{0}', space=vmem, size = 0x2000, scoped, tag = 'output window, operand 0']
    %10 = vsyncpa [#allocation3], 0
    %s11 = scalar_lea.sflag [#allocation3], 1
    %12 = vsyncpa %s11, 0
    %13 = vsyncpa [#allocation6], 0
    %14 = vsyncpa [#allocation4], 0
    %s15 = scalar_lea.sflag [#allocation4], 1
    %16 = vsyncpa %s15, 0
    loop: start=0, step=1, limit=4
    $region2: #{tpu_custom_call.1} parent=1 // loop_pre_header
      _
    $region3: #{tpu_custom_call.1} parent=1 // loop_header
      %s18 = sphi 0, %s22
      %p19 = scmp.ge.s32.totalorder %s18, 4
      %s25 = sphi 0, %s44
      %s26 = sphi 0, %s40
      %s27 = sphi 0, %s36
      %s28 = sphi 0, %s25
      %s29 = sphi 0, %s26
      %s30 = sphi 0, %s27
      %s31 = sphi 0, %s28
      %s32 = sphi 0, %s29
      %s33 = sphi 0, %s30
      %s47 = sphi 0, %s49
      %s50 = sphi 0, %s47
      %s51 = sphi 0, %s50
      %s67 = sphi 0, %s51
      %s73 = sphi 0, %s75
      %s76 = sphi 0, %s73
      %s77 = sphi 0, %s76
      %s93 = sphi 0, %s77
      %s99 = sphi 0, %s101
      %s102 = sphi 0, %s99
      %s103 = sphi 0, %s102
      %s119 = sphi 0, %s103
      %s127 = sphi 0, %s129
      %s130 = sphi 0, %s127
      %s131 = sphi 0, %s130
      %s147 = sphi 0, %s131
      %s153 = sphi 0, %s155
      %s156 = sphi 0, %s153
      %s157 = sphi 0, %s156
      %s173 = sphi 0, %s157
      %s181 = sphi 0, %s183
      %s184 = sphi 0, %s181
      %s185 = sphi 0, %s184
      %s201 = sphi 0, %s185
    $region4: #{tpu_custom_call.1} parent=1 // loop_header_branch
      %21 = sbr.rel (%p19) target = $region8
    $region5: #{tpu_custom_call.1} parent=1 // loop_body
      %s23 = ssub.s32 %s18, 1
      %s24 = ssub.s32 %s18, 2
      %s34 = sadd.s32 1, %s27
      %p35 = scmp.ge.s32.totalorder %s34, 1
      %s36 = scalar_select %p35, 0, %s34
      %s37 = sadd.s32 1, %s26
      %s38 = scalar_select %p35, %s37, %s26
      %p39 = scmp.ge.s32.totalorder %s38, 1
      %s40 = scalar_select %p39, 0, %s38
      %s41 = sadd.s32 1, %s25
      %s42 = scalar_select %p39, %s41, %s25
      %p43 = scmp.ge.s32.totalorder %s42, 2
      %s44 = scalar_select %p43, 0, %s42
      %s45 = ssub.s32 %s25, %s44
      %p46 = scmp.eq.s32.totalorder %s45, 0
      %s48 = sadd.s32 %s47, 1
      %s49 = scalar_select %p46, %s47, %s48
      %p52 = pneg %p46
      %p53 = scmp.eq.s32.totalorder %s18, 1
      %p54 = por %p52, %p53
      %p55 = scmp.ne.s32.totalorder %s47, %s50
      %p56 = scmp.eq.s32.totalorder %s18, 0
      %p57 = por %p55, %p56
      %p58 = scmp.ne.s32.totalorder %s47, %s50
      %p59 = scmp.eq.s32.totalorder %s23, 1
      %p60 = por %p58, %p59
      %p61 = scmp.ne.s32.totalorder %s50, %s51
      %p62 = scmp.eq.s32.totalorder %s23, 0
      %p63 = por %p61, %p62
      %p64 = scmp.ne.s32.totalorder %s50, %s51
      %p65 = scmp.eq.s32.totalorder %s24, 1
      %p66 = por %p64, %p65
      %p68 = scmp.ne.s32.totalorder %s51, %s67
      %p69 = scmp.eq.s32.totalorder %s24, 0
      %p70 = por %p68, %p69
      %s71 = ssub.s32 %s27, %s36
      %p72 = scmp.eq.s32.totalorder %s71, 0
      %s74 = sadd.s32 %s73, 1
      %s75 = scalar_select %p72, %s73, %s74
      %p78 = pneg %p72
      %p79 = scmp.eq.s32.totalorder %s18, 1
      %p80 = por %p78, %p79
      %p81 = scmp.ne.s32.totalorder %s73, %s76
      %p82 = scmp.eq.s32.totalorder %s18, 0
      %p83 = por %p81, %p82
      %p84 = scmp.ne.s32.totalorder %s73, %s76
      %p85 = scmp.eq.s32.totalorder %s23, 1
      %p86 = por %p84, %p85
      %p87 = scmp.ne.s32.totalorder %s76, %s77
      %p88 = scmp.eq.s32.totalorder %s23, 0
      %p89 = por %p87, %p88
      %p90 = scmp.ne.s32.totalorder %s76, %s77
      %p91 = scmp.eq.s32.totalorder %s24, 1
      %p92 = por %p90, %p91
      %p94 = scmp.ne.s32.totalorder %s77, %s93
      %p95 = scmp.eq.s32.totalorder %s24, 0
      %p96 = por %p94, %p95
      %s97 = ssub.s32 %s27, %s36
      %p98 = scmp.eq.s32.totalorder %s97, 0
      %s100 = sadd.s32 %s99, 1
      %s101 = scalar_select %p98, %s99, %s100
      %p104 = pneg %p98
      %p105 = scmp.eq.s32.totalorder %s18, 1
      %p106 = por %p104, %p105
      %p107 = scmp.ne.s32.totalorder %s99, %s102
      %p108 = scmp.eq.s32.totalorder %s18, 0
      %p109 = por %p107, %p108
      %p110 = scmp.ne.s32.totalorder %s99, %s102
      %p111 = scmp.eq.s32.totalorder %s23, 1
      %p112 = por %p110, %p111
      %p113 = scmp.ne.s32.totalorder %s102, %s103
      %p114 = scmp.eq.s32.totalorder %s23, 0
      %p115 = por %p113, %p114
      %p116 = scmp.ne.s32.totalorder %s102, %s103
      %p117 = scmp.eq.s32.totalorder %s24, 1
      %p118 = por %p116, %p117
      %p120 = scmp.ne.s32.totalorder %s103, %s119
      %p121 = scmp.eq.s32.totalorder %s24, 0
      %p122 = por %p120, %p121
      %s123 = ssub.s32 %s27, %s36
      %s124 = ssub.s32 %s26, %s40
      %s125 = sor.u32 %s123, %s124
      %p126 = scmp.eq.s32.totalorder %s125, 0
      %s128 = sadd.s32 %s127, 1
      %s129 = scalar_select %p126, %s127, %s128
      %p132 = pneg %p126
      %p133 = scmp.eq.s32.totalorder %s18, 1
      %p134 = por %p132, %p133
      %p135 = scmp.ne.s32.totalorder %s127, %s130
      %p136 = scmp.eq.s32.totalorder %s18, 0
      %p137 = por %p135, %p136
      %p138 = scmp.ne.s32.totalorder %s127, %s130
      %p139 = scmp.eq.s32.totalorder %s23, 1
      %p140 = por %p138, %p139
      %p141 = scmp.ne.s32.totalorder %s130, %s131
      %p142 = scmp.eq.s32.totalorder %s23, 0
      %p143 = por %p141, %p142
      %p144 = scmp.ne.s32.totalorder %s130, %s131
      %p145 = scmp.eq.s32.totalorder %s24, 1
      %p146 = por %p144, %p145
      %p148 = scmp.ne.s32.totalorder %s131, %s147
      %p149 = scmp.eq.s32.totalorder %s24, 0
      %p150 = por %p148, %p149
      %s151 = ssub.s32 %s26, %s40
      %p152 = scmp.eq.s32.totalorder %s151, 0
      %s154 = sadd.s32 %s153, 1
      %s155 = scalar_select %p152, %s153, %s154
      %p158 = pneg %p152
      %p159 = scmp.eq.s32.totalorder %s18, 1
      %p160 = por %p158, %p159
      %p161 = scmp.ne.s32.totalorder %s153, %s156
      %p162 = scmp.eq.s32.totalorder %s18, 0
      %p163 = por %p161, %p162
      %p164 = scmp.ne.s32.totalorder %s153, %s156
      %p165 = scmp.eq.s32.totalorder %s23, 1
      %p166 = por %p164, %p165
      %p167 = scmp.ne.s32.totalorder %s156, %s157
      %p168 = scmp.eq.s32.totalorder %s23, 0
      %p169 = por %p167, %p168
      %p170 = scmp.ne.s32.totalorder %s156, %s157
      %p171 = scmp.eq.s32.totalorder %s24, 1
      %p172 = por %p170, %p171
      %p174 = scmp.ne.s32.totalorder %s157, %s173
      %p175 = scmp.eq.s32.totalorder %s24, 0
      %p176 = por %p174, %p175
      %s177 = ssub.s32 %s25, %s44
      %s178 = ssub.s32 %s26, %s40
      %s179 = sor.u32 %s177, %s178
      %p180 = scmp.eq.s32.totalorder %s179, 0
      %s182 = sadd.s32 %s181, 1
      %s183 = scalar_select %p180, %s181, %s182
      %p186 = pneg %p180
      %p187 = scmp.eq.s32.totalorder %s18, 1
      %p188 = por %p186, %p187
      %p189 = scmp.ne.s32.totalorder %s181, %s184
      %p190 = scmp.eq.s32.totalorder %s18, 0
      %p191 = por %p189, %p190
      %p192 = scmp.ne.s32.totalorder %s181, %s184
      %p193 = scmp.eq.s32.totalorder %s23, 1
      %p194 = por %p192, %p193
      %p195 = scmp.ne.s32.totalorder %s184, %s185
      %p196 = scmp.eq.s32.totalorder %s23, 0
      %p197 = por %p195, %p196
      %p198 = scmp.ne.s32.totalorder %s184, %s185
      %p199 = scmp.eq.s32.totalorder %s24, 1
      %p200 = por %p198, %p199
      %p202 = scmp.ne.s32.totalorder %s185, %s201
      %p203 = scmp.eq.s32.totalorder %s24, 0
      %p204 = por %p202, %p203
      %p205 = scmp.le.s32.totalorder 1, %s18
      %p206 = scmp.lt.s32.totalorder %s18, 3
      %p207 = pnand %p205, %p206
      %p208 = pneg %p207
      // Predicated region
      $region9: #{tpu_custom_call.1} parent=5 // pred_check
        _
      $region10: #{tpu_custom_call.1} parent=5 // pred_check_branch
        %210 = sbr.rel (%p207) target = $region12
      $region11: #{tpu_custom_call.1} parent=5 // pred_region
        %s211 = ssub.s32 %s18, 1
        // Predicated region
        $region13: #{tpu_custom_call.1} parent=11 // pred_check
          %p212 = pneg %p89
        $region14: #{tpu_custom_call.1} parent=11 // pred_check_branch
          %214 = sbr.rel (%p212) target = $region16
        $region15: #{tpu_custom_call.1} parent=11 // pred_region
          %s216 = ssub.s32 2048, 2048
          %217 = vsyncadd [#allocation6], %s216
          %s218 = smul.addr %s30, 128
          %s219 = scalar_lea.hbm %s1, %s218
          %s220 = sshll.u32 [#allocation5], 4
          %s221 = int_to_ptr.vmem [resolvable:$true] %s220
          %226 = dma.hbm_to_vmem [thread:$0]  %s219, 2048, %s221, [#allocation6], 128, 128, 8
        $region16: #{tpu_custom_call.1} parent=11 // pred_fallthru
          _
        // Predicated region
        $region17: #{tpu_custom_call.1} parent=11 // pred_check
          %p227 = pneg %p115
        $region18: #{tpu_custom_call.1} parent=11 // pred_check_branch
          %229 = sbr.rel (%p227) target = $region20
        $region19: #{tpu_custom_call.1} parent=11 // pred_region
          %p230 = scmp.lt.s32.totalorder %s30, 0
          %s231 = scalar_select %p230, %s30, 0
          %s232 = scalar_lea.vmem %s2, %s231
        $region20: #{tpu_custom_call.1} parent=11 // pred_fallthru
          _
        // Predicated region
        $region21: #{tpu_custom_call.1} parent=11 // pred_check
          %p233 = pneg %p143
        $region22: #{tpu_custom_call.1} parent=11 // pred_check_branch
          %235 = sbr.rel (%p233) target = $region24
        $region23: #{tpu_custom_call.1} parent=11 // pred_region
          %s236 = smul.u32 16, %s30
          %s238 = ssub.s32 2048, 2048
          %239 = vsyncadd [#allocation6], %s238
          %s240 = sadd.s32 %s29, %s236
          %s241 = smul.addr %s240, 128
          %s242 = scalar_lea.hbm %s3, %s241
          %s243 = sshll.u32 [#allocation7], 4
          %s244 = int_to_ptr.vmem [resolvable:$true] %s243
          %249 = dma.hbm_to_vmem [thread:$0]  %s242, 2048, %s244, [#allocation6], 128, 128, 8
        $region24: #{tpu_custom_call.1} parent=11 // pred_fallthru
          _
        // Predicated region
        $region25: #{tpu_custom_call.1} parent=11 // pred_check
          %p250 = pneg %p169
        $region26: #{tpu_custom_call.1} parent=11 // pred_check_branch
          %252 = sbr.rel (%p250) target = $region28
        $region27: #{tpu_custom_call.1} parent=11 // pred_region
          %p253 = scmp.lt.s32.totalorder %s29, 0
          %s254 = scalar_select %p253, %s29, 0
          %s255 = scalar_lea.vmem %s4, %s254
        $region28: #{tpu_custom_call.1} parent=11 // pred_fallthru
          _
      $region12: #{tpu_custom_call.1} parent=5 // pred_fallthru
        _
      %p256 = scmp.lt.s32.totalorder %s18, 2
      // Predicated region
      $region29: #{tpu_custom_call.1} parent=5 // pred_check
        %p257 = pneg %p256
      $region30: #{tpu_custom_call.1} parent=5 // pred_check_branch
        %259 = sbr.rel (%p257) target = $region32
      $region31: #{tpu_custom_call.1} parent=5 // pred_region
        // Predicated region
        $region33: #{tpu_custom_call.1} parent=31 // pred_check
          %p260 = pneg %p57
        $region34: #{tpu_custom_call.1} parent=31 // pred_check_branch
          %262 = sbr.rel (%p260) target = $region36
        $region35: #{tpu_custom_call.1} parent=31 // pred_region
          %s263 = sand.u32 %s47, 1
          %s264 = scalar_lea.sflag [#allocation3], %s263
          %s265 = sand.u32 %s47, 1
          %s266 = smul.addr %s265, 8
          %s267 = scalar_lea.vmem [#allocation2], %s266
          %s269 = ssub.s32 128, 128
          %270 = vsyncadd %s264, %s269
          %s271 = smul.addr %s25, 128
          %s272 = scalar_lea.hbm %s0, %s271
          %s274 = sshll.u32 %s267, 4
          %s275 = int_to_ptr.vmem [resolvable:$true] %s274
          %277 = dma.hbm_to_vmem [thread:$0]  %s272, 128, %s275, %s264
        $region36: #{tpu_custom_call.1} parent=31 // pred_fallthru
          _
      $region32: #{tpu_custom_call.1} parent=5 // pred_fallthru
        _
      %p278 = scmp.le.s32.totalorder 1, %s18
      %p279 = scmp.lt.s32.totalorder %s18, 3
      %p280 = pnand %p278, %p279
      %p281 = pneg %p280
      // Predicated region
      $region37: #{tpu_custom_call.1} parent=5 // pred_check
        _
      $region38: #{tpu_custom_call.1} parent=5 // pred_check_branch
        %283 = sbr.rel (%p280) target = $region40
      $region39: #{tpu_custom_call.1} parent=5 // pred_region
        %s284 = ssub.s32 %s18, 1
        %s285 = sand.u32 %s50, 1
        %s286 = scalar_lea.sflag [#allocation3], %s285
        %s287 = sand.u32 %s50, 1
        %s288 = smul.addr %s287, 8
        %s289 = scalar_lea.vmem [#allocation2], %s288
        // Predicated region
        $region41: #{tpu_custom_call.1} parent=39 // pred_check
          %p290 = pneg %p63
        $region42: #{tpu_custom_call.1} parent=39 // pred_check_branch
          %292 = sbr.rel (%p290) target = $region44
        $region43: #{tpu_custom_call.1} parent=39 // pred_region
          %293 = dma.done %s286, 128
        $region44: #{tpu_custom_call.1} parent=39 // pred_fallthru
          _
        // Predicated region
        $region45: #{tpu_custom_call.1} parent=39 // pred_check
          %p294 = pneg %p89
        $region46: #{tpu_custom_call.1} parent=39 // pred_check_branch
          %296 = sbr.rel (%p294) target = $region48
        $region47: #{tpu_custom_call.1} parent=39 // pred_region
          %297 = dma.done [#allocation6], 2048
        $region48: #{tpu_custom_call.1} parent=39 // pred_fallthru
          _
        // Predicated region
        $region49: #{tpu_custom_call.1} parent=39 // pred_check
          %p298 = pneg %p143
        $region50: #{tpu_custom_call.1} parent=39 // pred_check_branch
          %300 = sbr.rel (%p298) target = $region52
        $region51: #{tpu_custom_call.1} parent=39 // pred_region
          %301 = dma.done [#allocation6], 2048
        $region52: #{tpu_custom_call.1} parent=39 // pred_fallthru
          _
        %s302 = sand.u32 %s50, 1
        %s303 = scalar_lea.sflag [#allocation3], %s302
        %s304 = sand.u32 %s50, 1
        %s305 = smul.addr %s304, 8
        %s306 = scalar_lea.vmem [#allocation2], %s305
        %p307 = pneg %p63
        %p308 = pneg %p60
        %p309 = pneg %p89
        %p310 = pneg %p86
        %p311 = scmp.lt.s32.totalorder %s30, 0
        %s312 = scalar_select %p311, %s30, 0
        %s313 = scalar_lea.vmem %s2, %s312
        %p314 = pneg %p115
        %p315 = pneg %p112
        %p316 = pneg %p143
        %p317 = pneg %p140
        %p318 = scmp.lt.s32.totalorder %s29, 0
        %s319 = scalar_select %p318, %s29, 0
        %s320 = scalar_lea.vmem %s4, %s319
        %p321 = pneg %p169
        %p322 = pneg %p166
        %p323 = pneg %p197
        %p324 = pneg %p194
        %s325 = sand.u32 %s184, 1
        %s326 = scalar_lea.sflag [#allocation4], %s325
        %s327 = sand.u32 %s184, 1
        %s328 = smul.addr %s327, 8
        %s329 = scalar_lea.vmem [#allocation8], %s328
        %p330 = scmp.lt.s32.totalorder %s30, 0
        %s331 = scalar_select %p330, %s30, 0
        %s332 = scalar_lea.vmem %s2, %s331
        %s333 = smul.u32 16, %s30
        %p334 = scmp.lt.s32.totalorder %s29, 0
        %s335 = scalar_select %p334, %s29, 0
        %s336 = scalar_lea.vmem %s4, %s335
        %p337 = scmp.eq.s32.totalorder %s30, 0
        // Predicated region
        $region53: #{tpu_custom_call.1} parent=39 // pred_check
          %p338 = pneg %p337
        $region54: #{tpu_custom_call.1} parent=39 // pred_check_branch
          %340 = sbr.rel (%p338) target = $region56
        $region55: #{tpu_custom_call.1} parent=39 // pred_region
          %v341 = vld [vmem:[%s336] sm:$0x1]
          %v343 = vlaneseq
          %v344 = vshrl.u32 %v343, 7
          %v345 = vsub.s32 0, %v344
          %v346 = vrot.slane %v341, %v345
          %348 = vst [vmem:[%s329] sm:$0xff] %v346
        $region56: #{tpu_custom_call.1} parent=39 // pred_fallthru
          _
        %v349 = vld [vmem:[%s289] sm:$0xff]
        %v350 = vld [vmem:[#allocation5] sm:$0xff]
        %v351 = vld [vmem:[#allocation5 + $0x8] sm:$0xff]
        %v352 = vld [vmem:[#allocation5 + $0x10] sm:$0xff]
        %v353 = vld [vmem:[#allocation5 + $0x18] sm:$0xff]
        %v354 = vld [vmem:[#allocation5 + $0x20] sm:$0xff]
        %v355 = vld [vmem:[#allocation5 + $0x28] sm:$0xff]
        %v356 = vld [vmem:[#allocation5 + $0x30] sm:$0xff]
        %v357 = vld [vmem:[#allocation5 + $0x38] sm:$0xff]
        %v358 = vld [vmem:[#allocation5 + $0x40] sm:$0xff]
        %v359 = vld [vmem:[#allocation5 + $0x48] sm:$0xff]
        %v360 = vld [vmem:[#allocation5 + $0x50] sm:$0xff]
        %v361 = vld [vmem:[#allocation5 + $0x58] sm:$0xff]
        %v362 = vld [vmem:[#allocation5 + $0x60] sm:$0xff]
        %v363 = vld [vmem:[#allocation5 + $0x68] sm:$0xff]
        %v364 = vld [vmem:[#allocation5 + $0x70] sm:$0xff]
        %v365 = vld [vmem:[#allocation5 + $0x78] sm:$0xff]
        %v366 = vld [vmem:[%s332] sm:$0x1]
        %v368 = vlaneseq
        %v369 = vshrl.u32 %v368, 7
        %v370 = vsub.s32 0, %v369
        %v371 = vrot.slane %v366, %v370
        %373 = vmatprep.subr.mxu0 0.0
        %374 = vmatpush1.msra.mxu0 %v350
        %375 = vmatprep.subr.mxu0 0.0
        %376 = vmatpush1.msra.mxu0 %v351
        %377 = vmatprep.subr.mxu0 0.0
        %378 = vmatpush1.msra.mxu0 %v352
        %379 = vmatprep.subr.mxu0 0.0
        %380 = vmatpush1.msra.mxu0 %v353
        %381 = vmatprep.subr.mxu0 0.0
        %382 = vmatpush1.msra.mxu0 %v354
        %383 = vmatprep.subr.mxu0 0.0
        %384 = vmatpush1.msra.mxu0 %v355
        %385 = vmatprep.subr.mxu0 0.0
        %386 = vmatpush1.msra.mxu0 %v356
        %387 = vmatprep.subr.mxu0 0.0
        %388 = vmatpush1.msra.mxu0 %v357
        %389 = vmatprep.subr.mxu0 0.0
        %390 = vmatpush1.msra.mxu0 %v358
        %391 = vmatprep.subr.mxu0 0.0
        %392 = vmatpush1.msra.mxu0 %v359
        %393 = vmatprep.subr.mxu0 0.0
        %394 = vmatpush1.msra.mxu0 %v360
        %395 = vmatprep.subr.mxu0 0.0
        %396 = vmatpush1.msra.mxu0 %v361
        %397 = vmatprep.subr.mxu0 0.0
        %398 = vmatpush1.msra.mxu0 %v362
        %399 = vmatprep.subr.mxu0 0.0
        %400 = vmatpush1.msra.mxu0 %v363
        %401 = vmatprep.subr.mxu0 0.0
        %402 = vmatpush1.msra.mxu0 %v364
        %403 = vmatprep.subr.mxu0 0.0
        %404 = vmatpush1.msra.mxu0 %v365
        %405 = vmatprep.subr.mxu0 0.0
        %406 = vmatpush1.msra.mxu0 0.0
        %407 = vmatprep.subr.mxu0 0.0
        %408 = vmatpush1.msra.mxu0 0.0
        %409 = vmatprep.subr.mxu0 0.0
        %410 = vmatpush1.msra.mxu0 0.0
        %411 = vmatprep.subr.mxu0 0.0
        %412 = vmatpush1.msra.mxu0 0.0
        %413 = vmatprep.subr.mxu0 0.0
        %414 = vmatpush1.msra.mxu0 0.0
        %415 = vmatprep.subr.mxu0 0.0
        %416 = vmatpush1.msra.mxu0 0.0
        %417 = vmatprep.subr.mxu0 0.0
        %418 = vmatpush1.msra.mxu0 0.0
        %419 = vmatprep.subr.mxu0 0.0
        %420 = vmatpush1.msra.mxu0 0.0
        %421 = vmatprep.subr.mxu0 0.0
        %422 = vmatpush1.msra.mxu0 0.0
        %423 = vmatprep.subr.mxu0 0.0
        %424 = vmatpush1.msra.mxu0 0.0
        %425 = vmatprep.subr.mxu0 0.0
        %426 = vmatpush1.msra.mxu0 0.0
        %427 = vmatprep.subr.mxu0 0.0
        %428 = vmatpush1.msra.mxu0 0.0
        %429 = vmatprep.subr.mxu0 0.0
        %430 = vmatpush1.msra.mxu0 0.0
        %431 = vmatprep.subr.mxu0 0.0
        %432 = vmatpush1.msra.mxu0 0.0
        %433 = vmatprep.subr.mxu0 0.0
        %434 = vmatpush1.msra.mxu0 0.0
        %435 = vmatprep.subr.mxu0 0.0
        %436 = vmatpush1.msra.mxu0 0.0
        %437 = vmatprep.mubr.f32.mxu0 0.0
        %438 = vmatmul.mubr.f32.gmra.mrb[0].mxu0 %v349
        %v439 = vpop.f32.mrb[0].mxu0
        %v440 = vadd.f32 %v371, %v439
        %v441 = vpop.f32.mrb[0].mxu0
        %442 = vdwg.mxu0
        %v443 = vmul.f32 %v440, 0.5
        %v444 = vmul.f32 %v440, 0.70710677
        %v445 = verf.f32.pop %v444
        %v446 = vadd.f32 %v445, 1.0
        %v447 = vmul.f32 %v443, %v446
        %v448 = vld [vmem:[%s329] sm:$0xff]
        %v449 = vld [vmem:[#allocation7] sm:$0xff]
        %v450 = vld [vmem:[#allocation7 + $0x8] sm:$0xff]
        %v451 = vld [vmem:[#allocation7 + $0x10] sm:$0xff]
        %v452 = vld [vmem:[#allocation7 + $0x18] sm:$0xff]
        %v453 = vld [vmem:[#allocation7 + $0x20] sm:$0xff]
        %v454 = vld [vmem:[#allocation7 + $0x28] sm:$0xff]
        %v455 = vld [vmem:[#allocation7 + $0x30] sm:$0xff]
        %v456 = vld [vmem:[#allocation7 + $0x38] sm:$0xff]
        %v457 = vld [vmem:[#allocation7 + $0x40] sm:$0xff]
        %v458 = vld [vmem:[#allocation7 + $0x48] sm:$0xff]
        %v459 = vld [vmem:[#allocation7 + $0x50] sm:$0xff]
        %v460 = vld [vmem:[#allocation7 + $0x58] sm:$0xff]
        %v461 = vld [vmem:[#allocation7 + $0x60] sm:$0xff]
        %v462 = vld [vmem:[#allocation7 + $0x68] sm:$0xff]
        %v463 = vld [vmem:[#allocation7 + $0x70] sm:$0xff]
        %v464 = vld [vmem:[#allocation7 + $0x78] sm:$0xff]
        %465 = vmatprep.subr.mxu0 0.0
        %466 = vmatpush1.msra.mxu0 %v449
        %467 = vmatprep.subr.mxu0 0.0
        %468 = vmatpush1.msra.mxu0 %v450
        %469 = vmatprep.subr.mxu0 0.0
        %470 = vmatpush1.msra.mxu0 %v451
        %471 = vmatprep.subr.mxu0 0.0
        %472 = vmatpush1.msra.mxu0 %v452
        %473 = vmatprep.subr.mxu0 0.0
        %474 = vmatpush1.msra.mxu0 %v453
        %475 = vmatprep.subr.mxu0 0.0
        %476 = vmatpush1.msra.mxu0 %v454
        %477 = vmatprep.subr.mxu0 0.0
        %478 = vmatpush1.msra.mxu0 %v455
        %479 = vmatprep.subr.mxu0 0.0
        %480 = vmatpush1.msra.mxu0 %v456
        %481 = vmatprep.subr.mxu0 0.0
        %482 = vmatpush1.msra.mxu0 %v457
        %483 = vmatprep.subr.mxu0 0.0
        %484 = vmatpush1.msra.mxu0 %v458
        %485 = vmatprep.subr.mxu0 0.0
        %486 = vmatpush1.msra.mxu0 %v459
        %487 = vmatprep.subr.mxu0 0.0
        %488 = vmatpush1.msra.mxu0 %v460
        %489 = vmatprep.subr.mxu0 0.0
        %490 = vmatpush1.msra.mxu0 %v461
        %491 = vmatprep.subr.mxu0 0.0
        %492 = vmatpush1.msra.mxu0 %v462
        %493 = vmatprep.subr.mxu0 0.0
        %494 = vmatpush1.msra.mxu0 %v463
        %495 = vmatprep.subr.mxu0 0.0
        %496 = vmatpush1.msra.mxu0 %v464
        %497 = vmatprep.subr.mxu0 0.0
        %498 = vmatpush1.msra.mxu0 0.0
        %499 = vmatprep.subr.mxu0 0.0
        %500 = vmatpush1.msra.mxu0 0.0
        %501 = vmatprep.subr.mxu0 0.0
        %502 = vmatpush1.msra.mxu0 0.0
        %503 = vmatprep.subr.mxu0 0.0
        %504 = vmatpush1.msra.mxu0 0.0
        %505 = vmatprep.subr.mxu0 0.0
        %506 = vmatpush1.msra.mxu0 0.0
        %507 = vmatprep.subr.mxu0 0.0
        %508 = vmatpush1.msra.mxu0 0.0
        %509 = vmatprep.subr.mxu0 0.0
        %510 = vmatpush1.msra.mxu0 0.0
        %511 = vmatprep.subr.mxu0 0.0
        %512 = vmatpush1.msra.mxu0 0.0
        %513 = vmatprep.subr.mxu0 0.0
        %514 = vmatpush1.msra.mxu0 0.0
        %515 = vmatprep.subr.mxu0 0.0
        %516 = vmatpush1.msra.mxu0 0.0
        %517 = vmatprep.subr.mxu0 0.0
        %518 = vmatpush1.msra.mxu0 0.0
        %519 = vmatprep.subr.mxu0 0.0
        %520 = vmatpush1.msra.mxu0 0.0
        %521 = vmatprep.subr.mxu0 0.0
        %522 = vmatpush1.msra.mxu0 0.0
        %523 = vmatprep.subr.mxu0 0.0
        %524 = vmatpush1.msra.mxu0 0.0
        %525 = vmatprep.subr.mxu0 0.0
        %526 = vmatpush1.msra.mxu0 0.0
        %527 = vmatprep.subr.mxu0 0.0
        %528 = vmatpush1.msra.mxu0 0.0
        %529 = vmatprep.mubr.f32.mxu0 0.0
        %530 = vmatmul.mubr.f32.gmra.mrb[0].mxu0 %v447
        %v531 = vpop.f32.mrb[0].mxu0
        %v532 = vadd.f32 0.0, %v531
        %v533 = vpop.f32.mrb[0].mxu0
        %534 = vdwg.mxu0
        %v535 = vadd.f32 %v448, %v532
        %536 = vst [vmem:[%s329] sm:$0xff] %v535
        %s537 = sand.u32 %s184, 1
        %s538 = scalar_lea.sflag [#allocation4], %s537
        %s539 = sand.u32 %s184, 1
        %s540 = smul.addr %s539, 8
        %s541 = scalar_lea.vmem [#allocation8], %s540
        // Predicated region
        $region57: #{tpu_custom_call.1} parent=39 // pred_check
          %p542 = pneg %p194
        $region58: #{tpu_custom_call.1} parent=39 // pred_check_branch
          %544 = sbr.rel (%p542) target = $region60
        $region59: #{tpu_custom_call.1} parent=39 // pred_region
          %s546 = ssub.s32 128, 128
          %547 = vsyncadd %s538, %s546
          %s548 = sadd.s32 %s29, %s28
          %s549 = smul.addr %s548, 128
          %s550 = scalar_lea.hbm %s5, %s549
          %s552 = sshll.u32 %s541, 4
          %s553 = int_to_ptr.vmem [resolvable:$true] %s552
          %555 = dma.vmem_to_hbm [thread:$0]  %s553, 128, %s550, %s538
        $region60: #{tpu_custom_call.1} parent=39 // pred_fallthru
          _
      $region40: #{tpu_custom_call.1} parent=5 // pred_fallthru
        _
      %p556 = scmp.le.s32.totalorder 2, %s18
      // Predicated region
      $region61: #{tpu_custom_call.1} parent=5 // pred_check
        %p557 = pneg %p556
      $region62: #{tpu_custom_call.1} parent=5 // pred_check_branch
        %559 = sbr.rel (%p557) target = $region64
      $region63: #{tpu_custom_call.1} parent=5 // pred_region
        %s560 = ssub.s32 %s18, 2
        // Predicated region
        $region65: #{tpu_custom_call.1} parent=63 // pred_check
          %p561 = pneg %p200
        $region66: #{tpu_custom_call.1} parent=63 // pred_check_branch
          %563 = sbr.rel (%p561) target = $region68
        $region67: #{tpu_custom_call.1} parent=63 // pred_region
          %s564 = sand.u32 %s185, 1
          %s565 = scalar_lea.sflag [#allocation4], %s564
          %s566 = sand.u32 %s185, 1
          %s567 = smul.addr %s566, 8
          %s568 = scalar_lea.vmem [#allocation8], %s567
          %569 = dma.done %s565, 128
        $region68: #{tpu_custom_call.1} parent=63 // pred_fallthru
          _
      $region64: #{tpu_custom_call.1} parent=5 // pred_fallthru
        _
    $region6: #{tpu_custom_call.1} parent=1 // loop_footer
      %s22 = sadd.s32 1, %s18
    $region7: #{tpu_custom_call.1} parent=1 // loop_footer_branch
      %17 = sbr.rel target = $region3
    $region8: #{tpu_custom_call.1} parent=1 // loop_exit
      _
    %570 = vsyncpa [#allocation3], 1
    %s571 = scalar_lea.sflag [#allocation3], 1
    %572 = vsyncpa %s571, 1
    %573 = vsyncpa [#allocation6], 1
    %574 = vsyncpa [#allocation4], 1
    %s575 = scalar_lea.sflag [#allocation4], 1
    %576 = vsyncpa %s575, 1

</llo_original>
